<compile_context>
chip_gen: v7x
topology: tpu7x:2x2x1
jax: 0.10.0
libtpu: 0.0.40
codegen_flags: <defaults>
</compile_context>

<pallas_src>
import math

import jax
import jax.numpy as jnp
from jax.experimental import pallas as pl
from jax.experimental.pallas import tpu as pltpu


def _round_up(x, m):
    return (x + m - 1) // m * m


# ---------------------------------------------------------------------------
# Hardware / tile selection helpers
# ---------------------------------------------------------------------------
def _vmem_capacity_bytes():
    """Physical VMEM capacity; conservative fallback if the query fails."""
    try:
        info = pltpu.get_tpu_info()
        cap = int(getattr(info, "vmem_capacity_bytes", 0))
        if cap > 0:
            return cap
    except Exception:
        pass
    return 64 * 1024 * 1024  # v7x per-core VMEM (smallest current generation)


def _pick_lane_tile(dim, cands, max_waste=1.25):
    """Largest 128-aligned tile whose padding waste stays bounded."""
    base = _round_up(dim, 128)
    best, best_pad = cands[-1], None
    for t in cands:  # descending
        padded = _round_up(dim, t)
        if padded <= max_waste * base:
            return t
        if best_pad is None or padded < best_pad:
            best, best_pad = t, padded
    return best


def _pick_sublane_tile(dim, cands, max_waste=1.25):
    """Largest 8-aligned tile whose padding waste stays bounded."""
    base = _round_up(dim, 8)
    best, best_pad = cands[-1], None
    for t in cands:
        padded = _round_up(dim, t)
        if padded <= max_waste * base:
            return t
        if best_pad is None or padded < best_pad:
            best, best_pad = t, padded
    return best


def _choose_tiles(N, K, itemsize, budget, max_resident_k):
    """Pick (tn, tk, tm_cap) so the worst-case working set fits the VMEM budget."""
    Kp128 = _round_up(K, 128)
    tn = _pick_lane_tile(N, (1024, 512, 256, 128))
    if Kp128 <= max_resident_k:
        tk = Kp128                        # full-K resident: no accumulator / K axis
    else:
        tk = _pick_lane_tile(K, (1024, 512, 256))
    tm_cap = 1024 if itemsize <= 2 else 512

    def usage(tm):
        # 2x for double-buffered input/output blocks; +f32 accumulator if K-tiled.
        u = 2 * (tm * tk + tk * tn + tm * tn + tn) * itemsize
        if _round_up(K, tk) > tk:
            u += tm * tn * 4
        return u

    def step_down(t):
        for c in (1024, 512, 256, 128):
            if c < t:
                return c
        return t

    while usage(tm_cap) > budget:
        if tm_cap > 256:
            tm_cap //= 2
        elif tk > 512:
            tk = step_down(tk)
        elif tn > 256:
            tn = step_down(tn)
        elif tk > 128:
            tk = step_down(tk)
        elif tn > 128:
            tn = step_down(tn)
        elif tm_cap > 8:
            tm_cap //= 2
        else:
            break
    return tn, tk, tm_cap


# ---------------------------------------------------------------------------
# Prepared parameters (pad/transpose ONCE, not per call)
# ---------------------------------------------------------------------------
@jax.tree_util.register_pytree_node_class
class LinearProjectionParams:
    """Prepared nn.Linear parameters: (K, N) weight + (1, N) bias, tile-padded."""

    def __init__(self, w_kn, b2d, in_dim, out_dim, tn, tk, tm_cap, vmem_limit):
        self.w_kn = w_kn                  # (Kp, Np)
        self.b2d = b2d                    # (1, Np)
        self.in_dim = int(in_dim)
        self.out_dim = int(out_dim)
        self.tn = int(tn)
        self.tk = int(tk)
        self.tm_cap = int(tm_cap)
        self.vmem_limit = int(vmem_limit)

    def tree_flatten(self):
        return ((self.w_kn, self.b2d),
                (self.in_dim, self.out_dim, self.tn, self.tk,
                 self.tm_cap, self.vmem_limit))

    @classmethod
    def tree_unflatten(cls, aux, children):
        return cls(*children, *aux)


def prepare_linear_params(weight, bias, *, max_resident_k=2048):
    """One-time preparation of torch-layout nn.Linear parameters.

    weight: (out_dim, in_dim) torch layout, bias: (out_dim,).
    Transposes weight to (in_dim, out_dim) (MXU-native RHS) and pads weight and
    bias to tile multiples once, so no per-call weight transpose/pad is paid.
    """
    out_dim, in_dim = weight.shape
    assert bias.shape == (out_dim,)
    itemsize = jnp.dtype(weight.dtype).itemsize

    cap = _vmem_capacity_bytes()
    budget = int(cap * 0.55)
    tn, tk, tm_cap = _choose_tiles(out_dim, in_dim, itemsize, budget, max_resident_k)

    Kp = _round_up(in_dim, tk)
    Np = _round_up(out_dim, tn)

    w_kn = jnp.transpose(weight)                                   # (K, N), once
    if (Kp, Np) != (in_dim, out_dim):
        w_kn = jnp.pad(w_kn, ((0, Kp - in_dim), (0, Np - out_dim)))
    b2d = bias.reshape(1, out_dim)
    if Np != out_dim:
        b2d = jnp.pad(b2d, ((0, 0), (0, Np - out_dim)))

    # Worst-case double-buffered working set (tm == tm_cap) + headroom.
    use = 2 * (tm_cap * tk + tk * tn + tm_cap * tn + tn) * itemsize
    if Kp > tk:
        use += tm_cap * tn * 4
    vmem_limit = int(min(cap * 0.9, max(use + (16 << 20), 32 << 20)))

    return LinearProjectionParams(w_kn, b2d, in_dim, out_dim, tn, tk, tm_cap, vmem_limit)


# ---------------------------------------------------------------------------
# Kernels
# ---------------------------------------------------------------------------
def _linear_kernel_fullk(x_ref, w_ref, b_ref, o_ref):
    """Full K resident in one block: y = x @ W_kn + b (no accumulator)."""
    acc = jnp.dot(x_ref[...], w_ref[...], preferred_element_type=jnp.float32)
    o_ref[...] = (acc + b_ref[...].astype(jnp.float32)).astype(o_ref.dtype)


def _linear_kernel_acc(x_ref, w_ref, b_ref, o_ref, acc_ref):
    """K-tiled path with an f32 VMEM accumulator resident across the K axis."""
    k = pl.program_id(2)
    part = jnp.dot(x_ref[...], w_ref[...], preferred_element_type=jnp.float32)

    @pl.when(k == 0)
    def _():
        acc_ref[...] = part               # direct store: no zero-fill + add

    @pl.when(k > 0)
    def _():
        acc_ref[...] += part

    @pl.when(k == pl.num_programs(2) - 1)
    def _():
        o_ref[...] = (acc_ref[...] + b_ref[...].astype(jnp.float32)).astype(o_ref.dtype)


# ---------------------------------------------------------------------------
# Wrapper
# ---------------------------------------------------------------------------
def _linear_2d(x2d, p):
    M, K = x2d.shape
    Kp, Np = p.w_kn.shape
    dtype = x2d.dtype
    itemsize = jnp.dtype(dtype).itemsize
    tn, tk, tm_cap = p.tn, p.tk, p.tm_cap

    # --- call-time M tiling (M = batch*seq varies per call) ------------------
    Mp8 = _round_up(M, 8)
    if Mp8 <= tm_cap:
        tm, Mp = Mp8, Mp8                 # gm == 1: weight streamed from HBM once
    else:
        cands = tuple(sorted({t for t in (tm_cap, 768, 512, 384, 256, 128)
                              if 8 <= t <= tm_cap}, reverse=True))
        tm = _pick_sublane_tile(M, cands)
        Mp = _round_up(M, tm)

    gm, gn, gk = Mp // tm, Np // tn, Kp // tk

    # --- guarantee >= 2 parallel blocks so v7x's 2nd TensorCore has work -----
    if gm * gn == 1:
        if tn >= 256:                     # halving keeps tn a multiple of 128
            tn //= 2
            gn = 2
        elif Mp8 >= 16:
            Mp = _round_up(M, 16)
            tm = Mp // 2
            gm = 2

    # --- pad activations only (weight/bias were padded once at prepare time) -
    if (Mp, Kp) != (M, K):
        x2d = jnp.pad(x2d, ((0, Mp - M), (0, Kp - K)))

    cost = pl.CostEstimate(
        flops=2 * Mp * Np * Kp,
        transcendentals=0,
        bytes_accessed=int((gn * Mp * Kp + gm * Kp * Np + Mp * Np + Np) * itemsize),
    )

    if gk == 1:
        out = pl.pallas_call(
            _linear_kernel_fullk,
            out_shape=jax.ShapeDtypeStruct((Mp, Np), dtype),
            grid_spec=pltpu.PrefetchScalarGridSpec(
                num_scalar_prefetch=0,
                grid=(gm, gn),
                in_specs=[
                    pl.BlockSpec((tm, Kp), lambda i, j: (i, 0)),   # x tile
                    pl.BlockSpec((Kp, tn), lambda i, j: (0, j)),   # W tile (K, N)
                    pl.BlockSpec((1, tn), lambda i, j: (0, j)),    # bias tile
                ],
                out_specs=pl.BlockSpec((tm, tn), lambda i, j: (i, j)),
            ),
            compiler_params=pltpu.CompilerParams(
                dimension_semantics=("parallel", "parallel"),
                vmem_limit_bytes=p.vmem_limit),
            cost_estimate=cost,
        )(x2d, p.w_kn, p.b2d)
    else:
        out = pl.pallas_call(
            _linear_kernel_acc,
            out_shape=jax.ShapeDtypeStruct((Mp, Np), dtype),
            grid_spec=pltpu.PrefetchScalarGridSpec(
                num_scalar_prefetch=0,
                grid=(gm, gn, gk),
                in_specs=[
                    pl.BlockSpec((tm, tk), lambda i, j, k: (i, k)),  # x tile
                    pl.BlockSpec((tk, tn), lambda i, j, k: (k, j)),  # W tile (K, N)
                    pl.BlockSpec((1, tn), lambda i, j, k: (0, j)),   # bias (k-invariant)
                ],
                out_specs=pl.BlockSpec((tm, tn), lambda i, j, k: (i, j)),
                scratch_shapes=[pltpu.VMEM((tm, tn), jnp.float32)],
            ),
            compiler_params=pltpu.CompilerParams(
                dimension_semantics=("parallel", "parallel", "arbitrary"),
                vmem_limit_bytes=p.vmem_limit),
            cost_estimate=cost,
        )(x2d, p.w_kn, p.b2d)

    if Mp != M or Np != p.out_dim:
        out = out[:M, :p.out_dim]
    return out


def linear_projection(x, params):
    """y = x @ weight.T + bias, matching torch.nn.Linear semantics.

    x: (..., input_dim); params: LinearProjectionParams (prepared once).
    Returns (..., output_dim).
    """
    orig_shape = x.shape
    assert orig_shape[-1] == params.in_dim
    assert x.dtype == params.w_kn.dtype, "x / weight dtype mismatch"
    x2d = x.reshape(-1, params.in_dim)
    out2d = _linear_2d(x2d, params)
    return out2d.reshape(*orig_shape[:-1], params.out_dim)


def init_linear_params(key, input_dim, output_dim, dtype=jnp.float32):
    """Torch-layout init mirroring nn.Linear defaults: U(-1/sqrt(K), 1/sqrt(K))."""
    kw, kb = jax.random.split(key)
    bound = 1.0 / math.sqrt(input_dim)
    weight = jax.random.uniform(kw, (output_dim, input_dim), dtype, -bound, bound)
    bias = jax.random.uniform(kb, (output_dim,), dtype, -bound, bound)
    return weight, bias


if __name__ == "__main__":
    key = jax.random.PRNGKey(0)
    k_x, k_p, k_x2, k_p2 = jax.random.split(key, 4)

    # Check 1: small shapes consistent with the module's forward (full-K path).
    batch, seq, input_dim, output_dim = 2, 8, 32, 64
    weight, bias = init_linear_params(k_p, input_dim, output_dim)
    params = prepare_linear_params(weight, bias)

    x = jax.random.normal(k_x, (batch, seq, input_dim), jnp.float32)
    y = linear_projection(x, params)
    jax.block_until_ready(y)
    y_ref = x @ weight.T + bias
    assert y.shape == (batch, seq, output_dim)
    assert jnp.allclose(y, y_ref, atol=1e-5, rtol=1e-5)

    # Check 2: force the K-tiled accumulator path (small shapes, tiny resident-K cap).
    M2, K2, N2 = 64, 640, 256
    w2, b2 = init_linear_params(k_p2, K2, N2)
    p2 = prepare_linear_params(w2, b2, max_resident_k=256)
    x2 = jax.random.normal(k_x2, (M2, K2), jnp.float32)
    y2 = linear_projection(x2, p2)
    jax.block_until_ready(y2)
    y2_ref = x2 @ w2.T + b2
    assert y2.shape == (M2, N2)
    assert jnp.allclose(y2, y2_ref, atol=1e-4, rtol=1e-4)

    print("KERNEL_OK")
</pallas_src>

<mosaic_0001>
module attributes {stable_mosaic.version = 11 : i64} {
  func.func @_linear_kernel_fullk(%arg0: i32, %arg1: i32, %arg2: memref<8x128xf32, #tpu.memory_space<vmem>>, %arg3: memref<128x128xf32, #tpu.memory_space<vmem>>, %arg4: memref<1x128xf32, #tpu.memory_space<vmem>>, %arg5: memref<8x128xf32, #tpu.memory_space<vmem>>) attributes {dimension_semantics = [#tpu.dimension_semantics<parallel>, #tpu.dimension_semantics<parallel>], iteration_bounds = array<i64: 2, 1>, scalar_prefetch = 0 : i64, scratch_operands = 0 : i64, tpu.core_type = #tpu.core_type<tc>, window_params = [{transform_indices = @transform_0, window_bounds = array<i64: 8, 128>}, {transform_indices = @transform_1, window_bounds = array<i64: 128, 128>}, {transform_indices = @transform_2, window_bounds = array<i64: 1, 128>}, {transform_indices = @transform_3, window_bounds = array<i64: 8, 128>}]} {
    %c0 = arith.constant 0 : index
    %c0_0 = arith.constant 0 : index
    %0 = vector.load %arg2[%c0, %c0_0] : memref<8x128xf32, #tpu.memory_space<vmem>>, vector<8x128xf32>
    %c0_1 = arith.constant 0 : index
    %c0_2 = arith.constant 0 : index
    %1 = vector.load %arg3[%c0_1, %c0_2] : memref<128x128xf32, #tpu.memory_space<vmem>>, vector<128x128xf32>
    %cst = arith.constant dense<0.000000e+00> : vector<8x128xf32>
    %2 = tpu.matmul %0, %1, %cst {dimension_numbers = #tpu.dot_dimension_numbers<[1], [0], [0], [1], [0, 0, 1, 1], [], []>} : vector<8x128xf32>, vector<128x128xf32>, vector<8x128xf32> -> vector<8x128xf32>
    %c0_3 = arith.constant 0 : index
    %c0_4 = arith.constant 0 : index
    %3 = vector.load %arg4[%c0_3, %c0_4] : memref<1x128xf32, #tpu.memory_space<vmem>>, vector<1x128xf32>
    %4 = vector.broadcast %3 : vector<1x128xf32> to vector<8x128xf32>
    %5 = arith.addf %2, %4 : vector<8x128xf32>
    %c0_5 = arith.constant 0 : index
    %c0_6 = arith.constant 0 : index
    %6 = vector.load %arg5[%c0_5, %c0_6] : memref<8x128xf32, #tpu.memory_space<vmem>>, vector<8x128xf32>
    tpu.vector_store %arg5[%c0_5, %c0_6], %5 {strides = array<i32>} : memref<8x128xf32, #tpu.memory_space<vmem>>, vector<8x128xf32>,
    return
  }
  func.func @transform_0(%arg0: i32, %arg1: i32) -> (i32, i32) {
    %c0_i32 = arith.constant 0 : i32
    %c0_i32_0 = arith.constant 0 : i32
    return %arg0, %c0_i32 : i32, i32
  }
  func.func @transform_1(%arg0: i32, %arg1: i32) -> (i32, i32) {
    %c0_i32 = arith.constant 0 : i32
    %c0_i32_0 = arith.constant 0 : i32
    return %c0_i32, %arg1 : i32, i32
  }
  func.func @transform_2(%arg0: i32, %arg1: i32) -> (i32, i32) {
    %c0_i32 = arith.constant 0 : i32
    %c0_i32_0 = arith.constant 0 : i32
    return %c0_i32, %arg1 : i32, i32
  }
  func.func @transform_3(%arg0: i32, %arg1: i32) -> (i32, i32) {
    %c0_i32 = arith.constant 0 : i32
    return %arg0, %arg1 : i32, i32
  }
}

</mosaic_0001>

<llo_original>
// kernel: tpu_custom_call.1
$region0: #{tpu_custom_call.1}
  #allocation0 [shape = 'u32[]', space=smem, size = 0x4, offset = 0x4, fixed_abs, tag = 'smem constant byte address 0x4 - core index']
  #allocation1 [shape = 'u32[144,128]{1,0:T(1,128)}', space=vmem, size = 0x12000, scoped, tag = 'internal scratch']
  %s0 = inlined_call_operand.hbm [shape: f32[16,128], index: 0, kind: input, shape index: {}]
  %s1 = inlined_call_operand.hbm [shape: f32[128,128], index: 1, kind: input, shape index: {}]
  %s2 = inlined_call_operand.vmem [shape: f32[1,128], index: 2, kind: input, shape index: {}]
  %s3 = inlined_call_operand.hbm [shape: f32[16,128], index: 3, kind: output, shape index: {}]
  %s4 = sld [smem:[#allocation0]]
  $region53: #{tpu_custom_call.1} parent=0
    _
  %s6 = ssub.s32 1, %s4
  %s7 = scalar_select 0, %s6, %s4
  $region1: #{tpu_custom_call.1} parent=0
    #allocation2 [shape = 'u8[8192]{0}', space=vmem, size = 0x2000, scoped, tag = 'input window, operand 0']
    #allocation3 [shape = 's32[2]{0}', space=sflag, size = 0x8, scoped, tag = 'scoped memory for tpu_custom_call.1']
    #allocation4 [shape = 's32[2]{0}', space=sflag, size = 0x8, scoped, tag = 'scoped memory for tpu_custom_call.1']
    #allocation5 [shape = 'u8[65536]{0}', space=vmem, size = 0x10000, scoped, tag = 'input window, operand 1, single buffered']
    #allocation6 [shape = 's32[1]{0}', space=sflag, size = 0x4, scoped, tag = 'scoped memory for tpu_custom_call.1']
    #allocation7 [shape = 'u8[8192]{0}', space=vmem, size = 0x2000, scoped, tag = 'output window, operand 0']
    %8 = vsyncpa [#allocation3], 0
    %s9 = scalar_lea.sflag [#allocation3], 1
    %10 = vsyncpa %s9, 0
    %11 = vsyncpa [#allocation6], 0
    %12 = vsyncpa [#allocation4], 0
    %s13 = scalar_lea.sflag [#allocation4], 1
    %14 = vsyncpa %s13, 0
    loop: start=0, step=1, limit=4
    $region2: #{tpu_custom_call.1} parent=1 // loop_pre_header
      _
    $region3: #{tpu_custom_call.1} parent=1 // loop_header
      %s16 = sphi 0, %s20
      %p17 = scmp.ge.s32.totalorder %s16, 4
      %s23 = sphi 0, %s35
      %s24 = sphi 0, %s31
      %s25 = sphi 0, %s23
      %s26 = sphi 0, %s24
      %s27 = sphi 0, %s25
      %s28 = sphi 0, %s26
      %s38 = sphi 0, %s40
      %s41 = sphi 0, %s38
      %s42 = sphi 0, %s41
      %s58 = sphi 0, %s42
      %s64 = sphi 0, %s66
      %s67 = sphi 0, %s64
      %s68 = sphi 0, %s67
      %s84 = sphi 0, %s68
      %s90 = sphi 0, %s92
      %s93 = sphi 0, %s90
      %s94 = sphi 0, %s93
      %s110 = sphi 0, %s94
      %s118 = sphi 0, %s120
      %s121 = sphi 0, %s118
      %s122 = sphi 0, %s121
      %s138 = sphi 0, %s122
    $region4: #{tpu_custom_call.1} parent=1 // loop_header_branch
      %19 = sbr.rel (%p17) target = $region8
    $region5: #{tpu_custom_call.1} parent=1 // loop_body
      %s21 = ssub.s32 %s16, 1
      %s22 = ssub.s32 %s16, 2
      %s29 = sadd.s32 1, %s24
      %p30 = scmp.ge.s32.totalorder %s29, 1
      %s31 = scalar_select %p30, 0, %s29
      %s32 = sadd.s32 1, %s23
      %s33 = scalar_select %p30, %s32, %s23
      %p34 = scmp.ge.s32.totalorder %s33, 2
      %s35 = scalar_select %p34, 0, %s33
      %s36 = ssub.s32 %s23, %s35
      %p37 = scmp.eq.s32.totalorder %s36, 0
      %s39 = sadd.s32 %s38, 1
      %s40 = scalar_select %p37, %s38, %s39
      %p43 = pneg %p37
      %p44 = scmp.eq.s32.totalorder %s16, 1
      %p45 = por %p43, %p44
      %p46 = scmp.ne.s32.totalorder %s38, %s41
      %p47 = scmp.eq.s32.totalorder %s16, 0
      %p48 = por %p46, %p47
      %p49 = scmp.ne.s32.totalorder %s38, %s41
      %p50 = scmp.eq.s32.totalorder %s21, 1
      %p51 = por %p49, %p50
      %p52 = scmp.ne.s32.totalorder %s41, %s42
      %p53 = scmp.eq.s32.totalorder %s21, 0
      %p54 = por %p52, %p53
      %p55 = scmp.ne.s32.totalorder %s41, %s42
      %p56 = scmp.eq.s32.totalorder %s22, 1
      %p57 = por %p55, %p56
      %p59 = scmp.ne.s32.totalorder %s42, %s58
      %p60 = scmp.eq.s32.totalorder %s22, 0
      %p61 = por %p59, %p60
      %s62 = ssub.s32 %s24, %s31
      %p63 = scmp.eq.s32.totalorder %s62, 0
      %s65 = sadd.s32 %s64, 1
      %s66 = scalar_select %p63, %s64, %s65
      %p69 = pneg %p63
      %p70 = scmp.eq.s32.totalorder %s16, 1
      %p71 = por %p69, %p70
      %p72 = scmp.ne.s32.totalorder %s64, %s67
      %p73 = scmp.eq.s32.totalorder %s16, 0
      %p74 = por %p72, %p73
      %p75 = scmp.ne.s32.totalorder %s64, %s67
      %p76 = scmp.eq.s32.totalorder %s21, 1
      %p77 = por %p75, %p76
      %p78 = scmp.ne.s32.totalorder %s67, %s68
      %p79 = scmp.eq.s32.totalorder %s21, 0
      %p80 = por %p78, %p79
      %p81 = scmp.ne.s32.totalorder %s67, %s68
      %p82 = scmp.eq.s32.totalorder %s22, 1
      %p83 = por %p81, %p82
      %p85 = scmp.ne.s32.totalorder %s68, %s84
      %p86 = scmp.eq.s32.totalorder %s22, 0
      %p87 = por %p85, %p86
      %s88 = ssub.s32 %s24, %s31
      %p89 = scmp.eq.s32.totalorder %s88, 0
      %s91 = sadd.s32 %s90, 1
      %s92 = scalar_select %p89, %s90, %s91
      %p95 = pneg %p89
      %p96 = scmp.eq.s32.totalorder %s16, 1
      %p97 = por %p95, %p96
      %p98 = scmp.ne.s32.totalorder %s90, %s93
      %p99 = scmp.eq.s32.totalorder %s16, 0
      %p100 = por %p98, %p99
      %p101 = scmp.ne.s32.totalorder %s90, %s93
      %p102 = scmp.eq.s32.totalorder %s21, 1
      %p103 = por %p101, %p102
      %p104 = scmp.ne.s32.totalorder %s93, %s94
      %p105 = scmp.eq.s32.totalorder %s21, 0
      %p106 = por %p104, %p105
      %p107 = scmp.ne.s32.totalorder %s93, %s94
      %p108 = scmp.eq.s32.totalorder %s22, 1
      %p109 = por %p107, %p108
      %p111 = scmp.ne.s32.totalorder %s94, %s110
      %p112 = scmp.eq.s32.totalorder %s22, 0
      %p113 = por %p111, %p112
      %s114 = ssub.s32 %s23, %s35
      %s115 = ssub.s32 %s24, %s31
      %s116 = sor.u32 %s114, %s115
      %p117 = scmp.eq.s32.totalorder %s116, 0
      %s119 = sadd.s32 %s118, 1
      %s120 = scalar_select %p117, %s118, %s119
      %p123 = pneg %p117
      %p124 = scmp.eq.s32.totalorder %s16, 1
      %p125 = por %p123, %p124
      %p126 = scmp.ne.s32.totalorder %s118, %s121
      %p127 = scmp.eq.s32.totalorder %s16, 0
      %p128 = por %p126, %p127
      %p129 = scmp.ne.s32.totalorder %s118, %s121
      %p130 = scmp.eq.s32.totalorder %s21, 1
      %p131 = por %p129, %p130
      %p132 = scmp.ne.s32.totalorder %s121, %s122
      %p133 = scmp.eq.s32.totalorder %s21, 0
      %p134 = por %p132, %p133
      %p135 = scmp.ne.s32.totalorder %s121, %s122
      %p136 = scmp.eq.s32.totalorder %s22, 1
      %p137 = por %p135, %p136
      %p139 = scmp.ne.s32.totalorder %s122, %s138
      %p140 = scmp.eq.s32.totalorder %s22, 0
      %p141 = por %p139, %p140
      %p142 = scmp.le.s32.totalorder 1, %s16
      %p143 = scmp.lt.s32.totalorder %s16, 3
      %p144 = pnand %p142, %p143
      %p145 = pneg %p144
      // Predicated region
      $region9: #{tpu_custom_call.1} parent=5 // pred_check
        _
      $region10: #{tpu_custom_call.1} parent=5 // pred_check_branch
        %147 = sbr.rel (%p144) target = $region12
      $region11: #{tpu_custom_call.1} parent=5 // pred_region
        %s148 = ssub.s32 %s16, 1
        // Predicated region
        $region13: #{tpu_custom_call.1} parent=11 // pred_check
          %p149 = pneg %p80
        $region14: #{tpu_custom_call.1} parent=11 // pred_check_branch
          %151 = sbr.rel (%p149) target = $region16
        $region15: #{tpu_custom_call.1} parent=11 // pred_region
          %s153 = ssub.s32 2048, 2048
          %154 = vsyncadd [#allocation6], %s153
          %s155 = smul.addr %s26, 128
          %s156 = scalar_lea.hbm %s1, %s155
          %s157 = sshll.u32 [#allocation5], 4
          %s158 = int_to_ptr.vmem [resolvable:$true] %s157
          %163 = dma.hbm_to_vmem [thread:$0]  %s156, 2048, %s158, [#allocation6], 128, 128, 8
        $region16: #{tpu_custom_call.1} parent=11 // pred_fallthru
          _
        // Predicated region
        $region17: #{tpu_custom_call.1} parent=11 // pred_check
          %p164 = pneg %p106
        $region18: #{tpu_custom_call.1} parent=11 // pred_check_branch
          %166 = sbr.rel (%p164) target = $region20
        $region19: #{tpu_custom_call.1} parent=11 // pred_region
          %p167 = scmp.lt.s32.totalorder %s26, 0
          %s168 = scalar_select %p167, %s26, 0
          %s169 = scalar_lea.vmem %s2, %s168
        $region20: #{tpu_custom_call.1} parent=11 // pred_fallthru
          _
      $region12: #{tpu_custom_call.1} parent=5 // pred_fallthru
        _
      %p170 = scmp.lt.s32.totalorder %s16, 2
      // Predicated region
      $region21: #{tpu_custom_call.1} parent=5 // pred_check
        %p171 = pneg %p170
      $region22: #{tpu_custom_call.1} parent=5 // pred_check_branch
        %173 = sbr.rel (%p171) target = $region24
      $region23: #{tpu_custom_call.1} parent=5 // pred_region
        // Predicated region
        $region25: #{tpu_custom_call.1} parent=23 // pred_check
          %p174 = pneg %p48
        $region26: #{tpu_custom_call.1} parent=23 // pred_check_branch
          %176 = sbr.rel (%p174) target = $region28
        $region27: #{tpu_custom_call.1} parent=23 // pred_region
          %s177 = sand.u32 %s38, 1
          %s178 = scalar_lea.sflag [#allocation3], %s177
          %s179 = sand.u32 %s38, 1
          %s180 = smul.addr %s179, 8
          %s181 = scalar_lea.vmem [#allocation2], %s180
          %s183 = ssub.s32 128, 128
          %184 = vsyncadd %s178, %s183
          %s185 = smul.addr %s23, 128
          %s186 = scalar_lea.hbm %s0, %s185
          %s188 = sshll.u32 %s181, 4
          %s189 = int_to_ptr.vmem [resolvable:$true] %s188
          %191 = dma.hbm_to_vmem [thread:$0]  %s186, 128, %s189, %s178
        $region28: #{tpu_custom_call.1} parent=23 // pred_fallthru
          _
      $region24: #{tpu_custom_call.1} parent=5 // pred_fallthru
        _
      %p192 = scmp.le.s32.totalorder 1, %s16
      %p193 = scmp.lt.s32.totalorder %s16, 3
      %p194 = pnand %p192, %p193
      %p195 = pneg %p194
      // Predicated region
      $region29: #{tpu_custom_call.1} parent=5 // pred_check
        _
      $region30: #{tpu_custom_call.1} parent=5 // pred_check_branch
        %197 = sbr.rel (%p194) target = $region32
      $region31: #{tpu_custom_call.1} parent=5 // pred_region
        %s198 = ssub.s32 %s16, 1
        %s199 = sand.u32 %s41, 1
        %s200 = scalar_lea.sflag [#allocation3], %s199
        %s201 = sand.u32 %s41, 1
        %s202 = smul.addr %s201, 8
        %s203 = scalar_lea.vmem [#allocation2], %s202
        // Predicated region
        $region33: #{tpu_custom_call.1} parent=31 // pred_check
          %p204 = pneg %p54
        $region34: #{tpu_custom_call.1} parent=31 // pred_check_branch
          %206 = sbr.rel (%p204) target = $region36
        $region35: #{tpu_custom_call.1} parent=31 // pred_region
          %207 = dma.done %s200, 128
        $region36: #{tpu_custom_call.1} parent=31 // pred_fallthru
          _
        // Predicated region
        $region37: #{tpu_custom_call.1} parent=31 // pred_check
          %p208 = pneg %p80
        $region38: #{tpu_custom_call.1} parent=31 // pred_check_branch
          %210 = sbr.rel (%p208) target = $region40
        $region39: #{tpu_custom_call.1} parent=31 // pred_region
          %211 = dma.done [#allocation6], 2048
        $region40: #{tpu_custom_call.1} parent=31 // pred_fallthru
          _
        %s212 = sand.u32 %s41, 1
        %s213 = scalar_lea.sflag [#allocation3], %s212
        %s214 = sand.u32 %s41, 1
        %s215 = smul.addr %s214, 8
        %s216 = scalar_lea.vmem [#allocation2], %s215
        %p217 = pneg %p54
        %p218 = pneg %p51
        %p219 = pneg %p80
        %p220 = pneg %p77
        %p221 = scmp.lt.s32.totalorder %s26, 0
        %s222 = scalar_select %p221, %s26, 0
        %s223 = scalar_lea.vmem %s2, %s222
        %p224 = pneg %p106
        %p225 = pneg %p103
        %p226 = pneg %p134
        %p227 = pneg %p131
        %s228 = sand.u32 %s121, 1
        %s229 = scalar_lea.sflag [#allocation4], %s228
        %s230 = sand.u32 %s121, 1
        %s231 = smul.addr %s230, 8
        %s232 = scalar_lea.vmem [#allocation7], %s231
        %p233 = scmp.lt.s32.totalorder %s26, 0
        %s234 = scalar_select %p233, %s26, 0
        %s235 = scalar_lea.vmem %s2, %s234
        %v236 = vld [vmem:[%s203] sm:$0xff]
        %v237 = vld [vmem:[#allocation5] sm:$0xff]
        %v238 = vld [vmem:[#allocation5 + $0x8] sm:$0xff]
        %v239 = vld [vmem:[#allocation5 + $0x10] sm:$0xff]
        %v240 = vld [vmem:[#allocation5 + $0x18] sm:$0xff]
        %v241 = vld [vmem:[#allocation5 + $0x20] sm:$0xff]
        %v242 = vld [vmem:[#allocation5 + $0x28] sm:$0xff]
        %v243 = vld [vmem:[#allocation5 + $0x30] sm:$0xff]
        %v244 = vld [vmem:[#allocation5 + $0x38] sm:$0xff]
        %v245 = vld [vmem:[#allocation5 + $0x40] sm:$0xff]
        %v246 = vld [vmem:[#allocation5 + $0x48] sm:$0xff]
        %v247 = vld [vmem:[#allocation5 + $0x50] sm:$0xff]
        %v248 = vld [vmem:[#allocation5 + $0x58] sm:$0xff]
        %v249 = vld [vmem:[#allocation5 + $0x60] sm:$0xff]
        %v250 = vld [vmem:[#allocation5 + $0x68] sm:$0xff]
        %v251 = vld [vmem:[#allocation5 + $0x70] sm:$0xff]
        %v252 = vld [vmem:[#allocation5 + $0x78] sm:$0xff]
        %v253 = vld [vmem:[%s235] sm:$0x1]
        %v255 = vlaneseq
        %v256 = vshrl.u32 %v255, 7
        %v257 = vsub.s32 0, %v256
        %v258 = vrot.slane %v253, %v257
        %260 = vmatprep.subr.mxu0 0.0
        %261 = vmatpush1.msra.mxu0 %v237
        %262 = vmatprep.subr.mxu0 0.0
        %263 = vmatpush1.msra.mxu0 %v238
        %264 = vmatprep.subr.mxu0 0.0
        %265 = vmatpush1.msra.mxu0 %v239
        %266 = vmatprep.subr.mxu0 0.0
        %267 = vmatpush1.msra.mxu0 %v240
        %268 = vmatprep.subr.mxu0 0.0
        %269 = vmatpush1.msra.mxu0 %v241
        %270 = vmatprep.subr.mxu0 0.0
        %271 = vmatpush1.msra.mxu0 %v242
        %272 = vmatprep.subr.mxu0 0.0
        %273 = vmatpush1.msra.mxu0 %v243
        %274 = vmatprep.subr.mxu0 0.0
        %275 = vmatpush1.msra.mxu0 %v244
        %276 = vmatprep.subr.mxu0 0.0
        %277 = vmatpush1.msra.mxu0 %v245
        %278 = vmatprep.subr.mxu0 0.0
        %279 = vmatpush1.msra.mxu0 %v246
        %280 = vmatprep.subr.mxu0 0.0
        %281 = vmatpush1.msra.mxu0 %v247
        %282 = vmatprep.subr.mxu0 0.0
        %283 = vmatpush1.msra.mxu0 %v248
        %284 = vmatprep.subr.mxu0 0.0
        %285 = vmatpush1.msra.mxu0 %v249
        %286 = vmatprep.subr.mxu0 0.0
        %287 = vmatpush1.msra.mxu0 %v250
        %288 = vmatprep.subr.mxu0 0.0
        %289 = vmatpush1.msra.mxu0 %v251
        %290 = vmatprep.subr.mxu0 0.0
        %291 = vmatpush1.msra.mxu0 %v252
        %292 = vmatprep.subr.mxu0 0.0
        %293 = vmatpush1.msra.mxu0 0.0
        %294 = vmatprep.subr.mxu0 0.0
        %295 = vmatpush1.msra.mxu0 0.0
        %296 = vmatprep.subr.mxu0 0.0
        %297 = vmatpush1.msra.mxu0 0.0
        %298 = vmatprep.subr.mxu0 0.0
        %299 = vmatpush1.msra.mxu0 0.0
        %300 = vmatprep.subr.mxu0 0.0
        %301 = vmatpush1.msra.mxu0 0.0
        %302 = vmatprep.subr.mxu0 0.0
        %303 = vmatpush1.msra.mxu0 0.0
        %304 = vmatprep.subr.mxu0 0.0
        %305 = vmatpush1.msra.mxu0 0.0
        %306 = vmatprep.subr.mxu0 0.0
        %307 = vmatpush1.msra.mxu0 0.0
        %308 = vmatprep.subr.mxu0 0.0
        %309 = vmatpush1.msra.mxu0 0.0
        %310 = vmatprep.subr.mxu0 0.0
        %311 = vmatpush1.msra.mxu0 0.0
        %312 = vmatprep.subr.mxu0 0.0
        %313 = vmatpush1.msra.mxu0 0.0
        %314 = vmatprep.subr.mxu0 0.0
        %315 = vmatpush1.msra.mxu0 0.0
        %316 = vmatprep.subr.mxu0 0.0
        %317 = vmatpush1.msra.mxu0 0.0
        %318 = vmatprep.subr.mxu0 0.0
        %319 = vmatpush1.msra.mxu0 0.0
        %320 = vmatprep.subr.mxu0 0.0
        %321 = vmatpush1.msra.mxu0 0.0
        %322 = vmatprep.subr.mxu0 0.0
        %323 = vmatpush1.msra.mxu0 0.0
        %324 = vmatprep.mubr.f32.mxu0 0.0
        %325 = vmatmul.mubr.f32.gmra.mrb[0].mxu0 %v236
        %v326 = vpop.f32.mrb[0].mxu0
        %v327 = vadd.f32 %v258, %v326
        %v328 = vpop.f32.mrb[0].mxu0
        %329 = vdwg.mxu0
        %330 = vst [vmem:[%s232] sm:$0xff] %v327
        %s331 = sand.u32 %s121, 1
        %s332 = scalar_lea.sflag [#allocation4], %s331
        %s333 = sand.u32 %s121, 1
        %s334 = smul.addr %s333, 8
        %s335 = scalar_lea.vmem [#allocation7], %s334
        // Predicated region
        $region41: #{tpu_custom_call.1} parent=31 // pred_check
          %p336 = pneg %p131
        $region42: #{tpu_custom_call.1} parent=31 // pred_check_branch
          %338 = sbr.rel (%p336) target = $region44
        $region43: #{tpu_custom_call.1} parent=31 // pred_region
          %s340 = ssub.s32 128, 128
          %341 = vsyncadd %s332, %s340
          %s342 = sadd.s32 %s26, %s25
          %s343 = smul.addr %s342, 128
          %s344 = scalar_lea.hbm %s3, %s343
          %s346 = sshll.u32 %s335, 4
          %s347 = int_to_ptr.vmem [resolvable:$true] %s346
          %349 = dma.vmem_to_hbm [thread:$0]  %s347, 128, %s344, %s332
        $region44: #{tpu_custom_call.1} parent=31 // pred_fallthru
          _
      $region32: #{tpu_custom_call.1} parent=5 // pred_fallthru
        _
      %p350 = scmp.le.s32.totalorder 2, %s16
      // Predicated region
      $region45: #{tpu_custom_call.1} parent=5 // pred_check
        %p351 = pneg %p350
      $region46: #{tpu_custom_call.1} parent=5 // pred_check_branch
        %353 = sbr.rel (%p351) target = $region48
      $region47: #{tpu_custom_call.1} parent=5 // pred_region
        %s354 = ssub.s32 %s16, 2
        // Predicated region
        $region49: #{tpu_custom_call.1} parent=47 // pred_check
          %p355 = pneg %p137
        $region50: #{tpu_custom_call.1} parent=47 // pred_check_branch
          %357 = sbr.rel (%p355) target = $region52
        $region51: #{tpu_custom_call.1} parent=47 // pred_region
          %s358 = sand.u32 %s122, 1
          %s359 = scalar_lea.sflag [#allocation4], %s358
          %s360 = sand.u32 %s122, 1
          %s361 = smul.addr %s360, 8
          %s362 = scalar_lea.vmem [#allocation7], %s361
          %363 = dma.done %s359, 128
        $region52: #{tpu_custom_call.1} parent=47 // pred_fallthru
          _
      $region48: #{tpu_custom_call.1} parent=5 // pred_fallthru
        _
    $region6: #{tpu_custom_call.1} parent=1 // loop_footer
      %s20 = sadd.s32 1, %s16
    $region7: #{tpu_custom_call.1} parent=1 // loop_footer_branch
      %15 = sbr.rel target = $region3
    $region8: #{tpu_custom_call.1} parent=1 // loop_exit
      _
    %364 = vsyncpa [#allocation3], 1
    %s365 = scalar_lea.sflag [#allocation3], 1
    %366 = vsyncpa %s365, 1
    %367 = vsyncpa [#allocation6], 1
    %368 = vsyncpa [#allocation4], 1
    %s369 = scalar_lea.sflag [#allocation4], 1
    %370 = vsyncpa %s369, 1

</llo_original>
